<compile_context>
chip_gen: v7x
topology: tpu7x:2x2x1
jax: 0.10.0
libtpu: 0.0.40
codegen_flags: <defaults>
</compile_context>

<pallas_src>
import jax
import jax.numpy as jnp
from jax import lax
from jax.experimental import pallas as pl
from jax.experimental.pallas import tpu as pltpu


def _is_v7x():
    try:
        return "v7" in jax.devices()[0].device_kind.lower()
    except Exception:
        return False


# ---------------------------------------------------------------------------
# Shared tiled  (M, K) @ (K, N) + b  kernel
#   used for (a) the hoisted input-gate projection and (b) the vocab projection
# ---------------------------------------------------------------------------
def matmul_bias_kernel(x_ref, w_ref, b_ref, o_ref):
    o_ref[...] = (
        jnp.dot(x_ref[...], w_ref[...], preferred_element_type=jnp.float32)
        + b_ref[...]
    ).astype(o_ref.dtype)


def tiled_matmul_bias(x, w, b, *, out_dtype, tm_cap, tn_cap, vmem_limit_bytes):
    """x: (M, K), w: (K, N) in MXU dtype, b: (1, N) f32 -> (M, N) out_dtype.

    Grid = (N-tiles OUTER, M-tiles INNER): the (K, tn) weight tile's block
    index is invariant across the inner axis, so Pallas DMAs each W tile from
    HBM once per N tile instead of once per (row-tile, N-tile) pair."""
    M, K = x.shape
    N = w.shape[1]
    tm = M if M <= tm_cap else tm_cap
    tn = N if N <= tn_cap else tn_cap
    grid = (pl.cdiv(N, tn), pl.cdiv(M, tm))
    return pl.pallas_call(
        matmul_bias_kernel,
        out_shape=jax.ShapeDtypeStruct((M, N), out_dtype),
        grid=grid,
        in_specs=[
            pl.BlockSpec((tm, K), lambda n, m: (m, 0)),   # activations (inner axis)
            pl.BlockSpec((K, tn), lambda n, m: (0, n)),   # weight tile (outer axis only)
            pl.BlockSpec((1, tn), lambda n, m: (0, n)),   # bias tile  (outer axis only)
        ],
        out_specs=pl.BlockSpec((tm, tn), lambda n, m: (m, n)),
        compiler_params=pltpu.CompilerParams(
            dimension_semantics=("parallel", "parallel"),
            vmem_limit_bytes=vmem_limit_bytes),
    )(x, w, b)


# ---------------------------------------------------------------------------
# LSTM recurrence kernel: the x-side projection is precomputed, so the serial
# per-step chain is only  h @ W_hh^T  + elementwise gate math.
# ---------------------------------------------------------------------------
def lstm_seq_kernel(xw_ref, whh_ref, hs_ref):
    """xw_ref : (T, Bs, 4H) f32   precomputed x @ W_ih^T + (b_ih + b_hh)
    whh_ref: (H, 4H)      mxu dtype, W_hh^T (loop-invariant, loaded once)
    hs_ref : (T, Bs, H)   mxu dtype, per-step hidden states (time-major)"""
    T, Bs, _ = xw_ref.shape
    H = hs_ref.shape[-1]

    w_hh = whh_ref[...]                       # loaded once, held in vregs/VMEM

    def sigmoid1(x):
        # One EUP op (tanh) instead of exp + reciprocal: halves EUP pressure
        # on the serial per-step critical path.
        return 0.5 + 0.5 * jnp.tanh(0.5 * x)

    # TODO(synk): if H is not a multiple of 128, the four gate slices below are
    # sub-lane masked selects (XLU) each step; pad H to 128 in production.
    def step(t, carry):
        h, c = carry                          # f32 (Bs, H) state, kept in vregs
        gates = xw_ref[t] + jnp.dot(h.astype(w_hh.dtype), w_hh,
                                    preferred_element_type=jnp.float32)
        # PyTorch LSTM gate order: input, forget, cell(g), output.
        i_g = sigmoid1(gates[:, 0 * H:1 * H])
        f_g = sigmoid1(gates[:, 1 * H:2 * H])
        g_g = jnp.tanh(gates[:, 2 * H:3 * H])
        o_g = sigmoid1(gates[:, 3 * H:4 * H])
        c_new = f_g * c + i_g * g_g
        h_new = o_g * jnp.tanh(c_new)
        hs_ref[t] = h_new.astype(hs_ref.dtype)  # dense (Bs, H) store, time-major
        return h_new, c_new

    h0 = jnp.zeros((Bs, H), jnp.float32)
    c0 = jnp.zeros((Bs, H), jnp.float32)
    # Fixed partial unroll: full for short captions, unroll=8 for long ones so
    # the LLO scheduler keeps visibility without unbounded code growth.
    lax.fori_loop(0, T, step, (h0, c0), unroll=min(T, 8))


# ---------------------------------------------------------------------------
# Forward pass
# ---------------------------------------------------------------------------
def decoder_rnn_forward(features, captions, params, *, mxu_dtype=jnp.bfloat16,
                        row_tile_cap=None, vocab_tile_cap=None,
                        logits_dtype=jnp.float32):
    """features: (B, E) f32, captions: (B, Tc) int32. Returns (B, Tc, V) logits."""
    embed_tbl = params["embed"]            # (V, E)
    w_ih = params["w_ih"]                  # (4H, E)
    w_hh = params["w_hh"]                  # (4H, H)
    b_ih = params["b_ih"]                  # (4H,)
    b_hh = params["b_hh"]                  # (4H,)
    w_lin = params["w_lin"]                # (V, H)
    b_lin = params["b_lin"]                # (V,)

    B, E = features.shape
    H = w_hh.shape[1]
    V = w_lin.shape[0]

    is_v7x = _is_v7x()
    if row_tile_cap is None:
        row_tile_cap = 512
    if vocab_tile_cap is None:
        # v7x has only 64 MiB VMEM -> cap tv at 2048; v5e/v6e (128 MiB) go bigger.
        vocab_tile_cap = 2048 if is_v7x else 4096
    proj_vmem = (48 if is_v7x else 64) * 1024 * 1024

    # --- glue (plain JAX): embedding lookup + prepend image features ---
    emb = embed_tbl[captions[:, :-1]]                           # (B, Tc-1, E)
    x = jnp.concatenate([features[:, None, :], emb], axis=1)    # (B, T, E)
    T = x.shape[1]
    x_tm = jnp.transpose(x, (1, 0, 2)).astype(mxu_dtype)        # time-major (T, B, E)

    w_ih_t = w_ih.T.astype(mxu_dtype)                           # (E, 4H)
    w_hh_t = w_hh.T.astype(mxu_dtype)                           # (H, 4H)
    b_all = (b_ih + b_hh)[None, :].astype(jnp.float32)          # (1, 4H)
    wlin_t = w_lin.T.astype(mxu_dtype)                          # (H, V)
    blin = b_lin[None, :].astype(jnp.float32)                   # (1, V)

    # --- kernel A: hoisted input-side projection, all T steps at once ---
    # (T*B, E) @ (E, 4H) + (b_ih + b_hh)  -> f32 (T, B, 4H), fully parallel.
    xw = tiled_matmul_bias(
        x_tm.reshape(T * B, E), w_ih_t, b_all,
        out_dtype=jnp.float32, tm_cap=row_tile_cap, tn_cap=vocab_tile_cap,
        vmem_limit_bytes=proj_vmem,
    ).reshape(T, B, 4 * H)

    # --- kernel B: serial LSTM recurrence (per-step work = h @ W_hh^T only) ---
    # On v7x, shard the (independent) batch rows across the 2 TensorCores.
    n_shards = 2 if (is_v7x and B >= 16 and B % 16 == 0) else 1
    Bs = B // n_shards
    # TODO(synk): for very long captions / large B, tile the T axis with
    # pltpu.emit_pipeline instead of keeping xw/hs fully VMEM-resident.
    hs = pl.pallas_call(
        lstm_seq_kernel,
        out_shape=jax.ShapeDtypeStruct((T, B, H), mxu_dtype),
        grid=(n_shards,),
        in_specs=[
            pl.BlockSpec((T, Bs, 4 * H), lambda i: (0, i, 0)),   # xw batch shard
            pl.BlockSpec((H, 4 * H), lambda i: (0, 0)),          # W_hh^T (shared)
        ],
        out_specs=pl.BlockSpec((T, Bs, H), lambda i: (0, i, 0)),
        compiler_params=pltpu.CompilerParams(
            dimension_semantics=("parallel",),
            vmem_limit_bytes=32 * 1024 * 1024),
    )(xw, w_hh_t)

    # --- kernel C: hoisted vocab projection (T*B, H) @ (H, V) + b_lin ---
    # V axis outer in the grid -> each W_lin tile streamed from HBM once.
    logits = tiled_matmul_bias(
        hs.reshape(T * B, H), wlin_t, blin,
        out_dtype=logits_dtype, tm_cap=row_tile_cap, tn_cap=vocab_tile_cap,
        vmem_limit_bytes=proj_vmem,
    )

    # time-major (T, B, V) -> batch-first (B, T, V) to match batch_first=True.
    return jnp.transpose(logits.reshape(T, B, V), (1, 0, 2))


def decoder_rnn_reference(features, captions, params):
    """Pure-JAX f32 reference with identical semantics (for verification)."""
    embed_tbl = params["embed"]
    w_ih, w_hh = params["w_ih"], params["w_hh"]
    b = params["b_ih"] + params["b_hh"]
    w_lin, b_lin = params["w_lin"], params["b_lin"]
    H = w_hh.shape[1]

    emb = embed_tbl[captions[:, :-1]]
    x = jnp.concatenate([features[:, None, :], emb], axis=1)  # (B, T, E)
    B = x.shape[0]

    def step(carry, x_t):
        h, c = carry
        gates = x_t @ w_ih.T + h @ w_hh.T + b
        i_g = jax.nn.sigmoid(gates[:, 0 * H:1 * H])
        f_g = jax.nn.sigmoid(gates[:, 1 * H:2 * H])
        g_g = jnp.tanh(gates[:, 2 * H:3 * H])
        o_g = jax.nn.sigmoid(gates[:, 3 * H:4 * H])
        c = f_g * c + i_g * g_g
        h = o_g * jnp.tanh(c)
        return (h, c), h

    h0 = jnp.zeros((B, H), jnp.float32)
    c0 = jnp.zeros((B, H), jnp.float32)
    _, hs = jax.lax.scan(step, (h0, c0), jnp.swapaxes(x, 0, 1))  # (T, B, H)
    hs = jnp.swapaxes(hs, 0, 1)                                  # (B, T, H)
    return hs @ w_lin.T + b_lin


if __name__ == "__main__":
    # Small shapes consistent with the module.
    embed_size, hidden_size, vocab_size = 32, 32, 128
    B, cap_len = 8, 8            # seq length fed to LSTM = 1 + (cap_len - 1) = 8

    key = jax.random.PRNGKey(0)
    ks = jax.random.split(key, 10)
    scale = 0.1
    params = {
        "embed": scale * jax.random.normal(ks[0], (vocab_size, embed_size), jnp.float32),
        "w_ih":  scale * jax.random.normal(ks[1], (4 * hidden_size, embed_size), jnp.float32),
        "w_hh":  scale * jax.random.normal(ks[2], (4 * hidden_size, hidden_size), jnp.float32),
        "b_ih":  scale * jax.random.normal(ks[3], (4 * hidden_size,), jnp.float32),
        "b_hh":  scale * jax.random.normal(ks[4], (4 * hidden_size,), jnp.float32),
        "w_lin": scale * jax.random.normal(ks[5], (vocab_size, hidden_size), jnp.float32),
        "b_lin": scale * jax.random.normal(ks[6], (vocab_size,), jnp.float32),
    }

    features = jax.random.normal(ks[7], (B, embed_size), jnp.float32)
    captions = jax.random.randint(ks[8], (B, cap_len), 0, vocab_size, jnp.int32)

    out = decoder_rnn_forward(features, captions, params)
    out = jax.block_until_ready(out)

    ref = decoder_rnn_reference(features, captions, params)
    assert out.shape == (B, cap_len, vocab_size), out.shape
    # bf16 MXU inputs (f32 accumulation / f32 gate math) vs f32 reference: loosened tolerance.
    assert jnp.allclose(out, ref, atol=2e-2, rtol=2e-2), \
        f"max abs err = {jnp.max(jnp.abs(out - ref))}"

    # TODO(synk): DecoderRNN.sample (host-side greedy decode loop with argmax
    # feedback) is not ported; it is an autoregressive control-flow loop, not a
    # single forward kernel.
    print("KERNEL_OK")
</pallas_src>

<mosaic_0001>
module attributes {stable_mosaic.version = 11 : i64} {
  func.func @matmul_bias_kernel(%arg0: i32, %arg1: i32, %arg2: memref<64x32xbf16, #tpu.memory_space<vmem>>, %arg3: memref<32x128xbf16, #tpu.memory_space<vmem>>, %arg4: memref<1x128xf32, #tpu.memory_space<vmem>>, %arg5: memref<64x128xf32, #tpu.memory_space<vmem>>) attributes {dimension_semantics = [#tpu.dimension_semantics<parallel>, #tpu.dimension_semantics<parallel>], iteration_bounds = array<i64: 1, 1>, scalar_prefetch = 0 : i64, scratch_operands = 0 : i64, tpu.core_type = #tpu.core_type<tc>, window_params = [{transform_indices = @transform_0, window_bounds = array<i64: 64, 32>}, {transform_indices = @transform_1, window_bounds = array<i64: 32, 128>}, {transform_indices = @transform_2, window_bounds = array<i64: 1, 128>}, {transform_indices = @transform_3, window_bounds = array<i64: 64, 128>}]} {
    %c0 = arith.constant 0 : index
    %c0_0 = arith.constant 0 : index
    %0 = vector.load %arg2[%c0, %c0_0] : memref<64x32xbf16, #tpu.memory_space<vmem>>, vector<64x32xbf16>
    %c0_1 = arith.constant 0 : index
    %c0_2 = arith.constant 0 : index
    %1 = vector.load %arg3[%c0_1, %c0_2] : memref<32x128xbf16, #tpu.memory_space<vmem>>, vector<32x128xbf16>
    %cst = arith.constant dense<0.000000e+00> : vector<64x128xf32>
    %2 = tpu.matmul %0, %1, %cst {dimension_numbers = #tpu.dot_dimension_numbers<[1], [0], [0], [1], [0, 0, 1, 1], [], []>} : vector<64x32xbf16>, vector<32x128xbf16>, vector<64x128xf32> -> vector<64x128xf32>
    %c0_3 = arith.constant 0 : index
    %c0_4 = arith.constant 0 : index
    %3 = vector.load %arg4[%c0_3, %c0_4] : memref<1x128xf32, #tpu.memory_space<vmem>>, vector<1x128xf32>
    %4 = vector.broadcast %3 : vector<1x128xf32> to vector<64x128xf32>
    %5 = arith.addf %2, %4 : vector<64x128xf32>
    %c0_5 = arith.constant 0 : index
    %c0_6 = arith.constant 0 : index
    %6 = vector.load %arg5[%c0_5, %c0_6] : memref<64x128xf32, #tpu.memory_space<vmem>>, vector<64x128xf32>
    tpu.vector_store %arg5[%c0_5, %c0_6], %5 {strides = array<i32>} : memref<64x128xf32, #tpu.memory_space<vmem>>, vector<64x128xf32>,
    return
  }
  func.func @transform_0(%arg0: i32, %arg1: i32) -> (i32, i32) {
    %c0_i32 = arith.constant 0 : i32
    %c0_i32_0 = arith.constant 0 : i32
    return %arg1, %c0_i32 : i32, i32
  }
  func.func @transform_1(%arg0: i32, %arg1: i32) -> (i32, i32) {
    %c0_i32 = arith.constant 0 : i32
    %c0_i32_0 = arith.constant 0 : i32
    return %c0_i32, %arg0 : i32, i32
  }
  func.func @transform_2(%arg0: i32, %arg1: i32) -> (i32, i32) {
    %c0_i32 = arith.constant 0 : i32
    %c0_i32_0 = arith.constant 0 : i32
    return %c0_i32, %arg0 : i32, i32
  }
  func.func @transform_3(%arg0: i32, %arg1: i32) -> (i32, i32) {
    %c0_i32 = arith.constant 0 : i32
    return %arg1, %arg0 : i32, i32
  }
}

</mosaic_0001>

<llo_original>
// kernel: tpu_custom_call.1
$region0: #{tpu_custom_call.1}
  #allocation0 [shape = 'u32[]', space=smem, size = 0x4, offset = 0x4, fixed_abs, tag = 'smem constant byte address 0x4 - core index']
  #allocation1 [shape = 'u32[144,128]{1,0:T(1,128)}', space=vmem, size = 0x12000, scoped, tag = 'internal scratch']
  %s0 = inlined_call_operand.hbm [shape: bf16[64,32], index: 0, kind: input, shape index: {}]
  %s1 = inlined_call_operand.hbm [shape: bf16[32,128], index: 1, kind: input, shape index: {}]
  %s2 = inlined_call_operand.hbm [shape: f32[1,128], index: 2, kind: input, shape index: {}]
  %s3 = inlined_call_operand.hbm [shape: f32[64,128], index: 3, kind: output, shape index: {}]
  %s4 = sld [smem:[#allocation0]]
  $region34: #{tpu_custom_call.1} parent=0
    _
  %s6 = ssub.s32 1, %s4
  %s7 = scalar_select 0, %s6, %s4
  $region1: #{tpu_custom_call.1} parent=0
    #allocation2 [shape = 'u8[16384]{0}', space=vmem, size = 0x4000, scoped, tag = 'input window, operand 0, single buffered']
    #allocation3 [shape = 's32[1]{0}', space=sflag, size = 0x4, scoped, tag = 'scoped memory for tpu_custom_call.1']
    #allocation4 [shape = 's32[1]{0}', space=sflag, size = 0x4, scoped, tag = 'scoped memory for tpu_custom_call.1']
    #allocation5 [shape = 'u8[8192]{0}', space=vmem, size = 0x2000, scoped, tag = 'input window, operand 1, single buffered']
    #allocation6 [shape = 's32[1]{0}', space=sflag, size = 0x4, scoped, tag = 'scoped memory for tpu_custom_call.1']
    #allocation7 [shape = 'u8[512]{0}', space=vmem, size = 0x400, scoped, tag = 'input window, operand 2, single buffered']
    #allocation8 [shape = 'u8[32768]{0}', space=vmem, size = 0x8000, scoped, tag = 'output window, operand 0, single buffered']
    %8 = vsyncpa [#allocation3], 0
    %9 = vsyncpa [#allocation6], 0
    %10 = vsyncpa [#allocation4], 0
    // Predicated region
    $region2: #{tpu_custom_call.1} parent=1 // pred_check
      _
    $region3: #{tpu_custom_call.1} parent=1 // pred_check_branch
      %12 = sbr.rel (0) target = $region5
    $region4: #{tpu_custom_call.1} parent=1 // pred_region
      %s14 = ssub.s32 512, 512
      %15 = vsyncadd [#allocation3], %s14
      %s16 = sshll.u32 [#allocation2], 4
      %s17 = int_to_ptr.vmem [resolvable:$true] %s16
      %22 = dma.hbm_to_vmem [thread:$0]  %s0, 512, %s17, [#allocation3], 64, 64, 4
    $region5: #{tpu_custom_call.1} parent=1 // pred_fallthru
      _
    // Predicated region
    $region6: #{tpu_custom_call.1} parent=1 // pred_check
      _
    $region7: #{tpu_custom_call.1} parent=1 // pred_check_branch
      %24 = sbr.rel (0) target = $region9
    $region8: #{tpu_custom_call.1} parent=1 // pred_region
      %s26 = ssub.s32 256, 256
      %27 = vsyncadd [#allocation6], %s26
      %s28 = sshll.u32 [#allocation5], 4
      %s29 = int_to_ptr.vmem [resolvable:$true] %s28
      %34 = dma.hbm_to_vmem [thread:$0]  %s1, 256, %s29, [#allocation6], 64, 64, 4
    $region9: #{tpu_custom_call.1} parent=1 // pred_fallthru
      _
    // Predicated region
    $region10: #{tpu_custom_call.1} parent=1 // pred_check
      _
    $region11: #{tpu_custom_call.1} parent=1 // pred_check_branch
      %36 = sbr.rel (0) target = $region13
    $region12: #{tpu_custom_call.1} parent=1 // pred_region
      %s38 = ssub.s32 16, 16
      %39 = vsyncadd [#allocation6], %s38
      %s41 = sshll.u32 [#allocation7], 4
      %s42 = int_to_ptr.vmem [resolvable:$true] %s41
      %44 = dma.hbm_to_vmem [thread:$0]  %s2, 16, %s42, [#allocation6]
    $region13: #{tpu_custom_call.1} parent=1 // pred_fallthru
      _
    // Predicated region
    $region14: #{tpu_custom_call.1} parent=1 // pred_check
      _
    $region15: #{tpu_custom_call.1} parent=1 // pred_check_branch
      %46 = sbr.rel (0) target = $region17
    $region16: #{tpu_custom_call.1} parent=1 // pred_region
      %47 = dma.done [#allocation3], 512
    $region17: #{tpu_custom_call.1} parent=1 // pred_fallthru
      _
    // Predicated region
    $region18: #{tpu_custom_call.1} parent=1 // pred_check
      _
    $region19: #{tpu_custom_call.1} parent=1 // pred_check_branch
      %49 = sbr.rel (0) target = $region21
    $region20: #{tpu_custom_call.1} parent=1 // pred_region
      %50 = dma.done [#allocation6], 256
    $region21: #{tpu_custom_call.1} parent=1 // pred_fallthru
      _
    // Predicated region
    $region22: #{tpu_custom_call.1} parent=1 // pred_check
      _
    $region23: #{tpu_custom_call.1} parent=1 // pred_check_branch
      %52 = sbr.rel (0) target = $region25
    $region24: #{tpu_custom_call.1} parent=1 // pred_region
      %53 = dma.done [#allocation6], 16
    $region25: #{tpu_custom_call.1} parent=1 // pred_fallthru
      _
    %v55 = vld [vmem:[#allocation2] sm:$0xf]
    %v56 = vld [vmem:[#allocation2 + $0x4] sm:$0xf]
    %v57 = vld [vmem:[#allocation2 + $0x8] sm:$0xf]
    %v58 = vld [vmem:[#allocation2 + $0xc] sm:$0xf]
    %v59 = vld [vmem:[#allocation2 + $0x10] sm:$0xf]
    %v60 = vld [vmem:[#allocation2 + $0x14] sm:$0xf]
    %v61 = vld [vmem:[#allocation2 + $0x18] sm:$0xf]
    %v62 = vld [vmem:[#allocation2 + $0x1c] sm:$0xf]
    %v63 = vld [vmem:[#allocation5] sm:$0xf]
    %v64 = vld [vmem:[#allocation5 + $0x4] sm:$0xf]
    %v65 = vld [vmem:[#allocation5 + $0x8] sm:$0xf]
    %v66 = vld [vmem:[#allocation5 + $0xc] sm:$0xf]
    %v67 = vld [vmem:[#allocation7] sm:$0x1]
    %v69 = vlaneseq
    %v70 = vshrl.u32 %v69, 7
    %v71 = vsub.s32 0, %v70
    %v72 = vrot.slane %v67, %v71
    %v82 = vunpack.c.l.b16 %v55
    %v83 = vunpack.c.l.b16 %v56
    %v84 = vunpack.c.l.b16 %v57
    %v85 = vunpack.c.l.b16 %v58
    %v86 = vunpack.c.l.b16 %v59
    %v87 = vunpack.c.l.b16 %v60
    %v88 = vunpack.c.l.b16 %v61
    %v89 = vunpack.c.l.b16 %v62
    %v90 = vpack.c.b16 %v83, %v82
    %v91 = vpack.c.b16 %v85, %v84
    %v92 = vpack.c.b16 %v87, %v86
    %v93 = vpack.c.b16 %v89, %v88
    %v98 = vunpack.c.l.b16 %v63
    %v99 = vunpack.c.l.b16 %v64
    %v100 = vunpack.c.l.b16 %v65
    %v101 = vunpack.c.l.b16 %v66
    %v102 = vpack.c.b16 %v99, %v98
    %v103 = vpack.c.b16 %v101, %v100
    %vm106 = vcmask 261120
    %v108 = vsel %vm106, %v90, 0
    %v111 = vsel %vm106, %v91, 0
    %v114 = vsel %vm106, %v92, 0
    %v117 = vsel %vm106, %v93, 0
    %119 = vmatprep.subr.bf16.mxu0 0
    %120 = vmatpush1.bf16.msra.mxu0 %v102
    %121 = vmatprep.subr.bf16.mxu0 0
    %122 = vmatpush1.bf16.msra.mxu0 %v103
    %123 = vmatprep.subr.bf16.mxu0 0
    %124 = vmatpush1.bf16.msra.mxu0 0
    %125 = vmatprep.subr.bf16.mxu0 0
    %126 = vmatpush1.bf16.msra.mxu0 0
    %127 = vmatprep.subr.bf16.mxu0 0
    %128 = vmatpush1.bf16.msra.mxu0 0
    %129 = vmatprep.subr.bf16.mxu0 0
    %130 = vmatpush1.bf16.msra.mxu0 0
    %131 = vmatprep.subr.bf16.mxu0 0
    %132 = vmatpush1.bf16.msra.mxu0 0
    %133 = vmatprep.subr.bf16.mxu0 0
    %134 = vmatpush1.bf16.msra.mxu0 0
    %135 = vmatprep.subr.bf16.mxu0 0
    %136 = vmatpush1.bf16.msra.mxu0 0
    %137 = vmatprep.subr.bf16.mxu0 0
    %138 = vmatpush1.bf16.msra.mxu0 0
    %139 = vmatprep.subr.bf16.mxu0 0
    %140 = vmatpush1.bf16.msra.mxu0 0
    %141 = vmatprep.subr.bf16.mxu0 0
    %142 = vmatpush1.bf16.msra.mxu0 0
    %143 = vmatprep.subr.bf16.mxu0 0
    %144 = vmatpush1.bf16.msra.mxu0 0
    %145 = vmatprep.subr.bf16.mxu0 0
    %146 = vmatpush1.bf16.msra.mxu0 0
    %147 = vmatprep.subr.bf16.mxu0 0
    %148 = vmatpush1.bf16.msra.mxu0 0
    %149 = vmatprep.subr.bf16.mxu0 0
    %150 = vmatpush1.bf16.msra.mxu0 0
    %151 = vmatprep.mubr.bf16.mxu0 0
    %152 = vmatmul.mubr.bf16.gmra.mrb[0].mxu0 %v108
    %v153 = vpop.f32.mrb[0].mxu0
    %v154 = vadd.f32 %v72, %v153
    %v155 = vpop.f32.mrb[0].mxu0
    %v156 = vpop.f32.mrb[0].mxu0
    %v157 = vadd.f32 %v72, %v156
    %v158 = vpop.f32.mrb[0].mxu0
    %159 = vmatprep.mubr.bf16.mxu0 0
    %160 = vmatmul.mubr.bf16.gmra.mrb[0].mxu0 %v111
    %v161 = vpop.f32.mrb[0].mxu0
    %v162 = vadd.f32 %v72, %v161
    %v163 = vpop.f32.mrb[0].mxu0
    %v164 = vpop.f32.mrb[0].mxu0
    %v165 = vadd.f32 %v72, %v164
    %v166 = vpop.f32.mrb[0].mxu0
    %167 = vmatprep.mubr.bf16.mxu0 0
    %168 = vmatmul.mubr.bf16.gmra.mrb[0].mxu0 %v114
    %v169 = vpop.f32.mrb[0].mxu0
    %v170 = vadd.f32 %v72, %v169
    %v171 = vpop.f32.mrb[0].mxu0
    %v172 = vpop.f32.mrb[0].mxu0
    %v173 = vadd.f32 %v72, %v172
    %v174 = vpop.f32.mrb[0].mxu0
    %175 = vmatprep.mubr.bf16.mxu0 0
    %176 = vmatmul.mubr.bf16.gmra.mrb[0].mxu0 %v117
    %v177 = vpop.f32.mrb[0].mxu0
    %v178 = vadd.f32 %v72, %v177
    %v179 = vpop.f32.mrb[0].mxu0
    %v180 = vpop.f32.mrb[0].mxu0
    %v181 = vadd.f32 %v72, %v180
    %v182 = vpop.f32.mrb[0].mxu0
    %183 = vdwg.mxu0
    %184 = vst [vmem:[#allocation8] sm:$0xff] %v154
    %185 = vst [vmem:[#allocation8 + $0x8] sm:$0xff] %v157
    %186 = vst [vmem:[#allocation8 + $0x10] sm:$0xff] %v162
    %187 = vst [vmem:[#allocation8 + $0x18] sm:$0xff] %v165
    %188 = vst [vmem:[#allocation8 + $0x20] sm:$0xff] %v170
    %189 = vst [vmem:[#allocation8 + $0x28] sm:$0xff] %v173
    %190 = vst [vmem:[#allocation8 + $0x30] sm:$0xff] %v178
    %191 = vst [vmem:[#allocation8 + $0x38] sm:$0xff] %v181
    // Predicated region
    $region26: #{tpu_custom_call.1} parent=1 // pred_check
      _
    $region27: #{tpu_custom_call.1} parent=1 // pred_check_branch
      %193 = sbr.rel (0) target = $region29
    $region28: #{tpu_custom_call.1} parent=1 // pred_region
      %s195 = ssub.s32 1024, 1024
      %196 = vsyncadd [#allocation4], %s195
      %s197 = sshll.u32 [#allocation8], 4
      %s198 = int_to_ptr.vmem [resolvable:$true] %s197
      %203 = dma.vmem_to_hbm [thread:$0]  %s198, 1024, %s3, [#allocation4], 128, 128, 8
    $region29: #{tpu_custom_call.1} parent=1 // pred_fallthru
      _
    // Predicated region
    $region30: #{tpu_custom_call.1} parent=1 // pred_check
      _
    $region31: #{tpu_custom_call.1} parent=1 // pred_check_branch
      %205 = sbr.rel (0) target = $region33
    $region32: #{tpu_custom_call.1} parent=1 // pred_region
      %206 = dma.done [#allocation4], 1024
    $region33: #{tpu_custom_call.1} parent=1 // pred_fallthru
      _
    %207 = vsyncpa [#allocation3], 1
    %208 = vsyncpa [#allocation6], 1
    %209 = vsyncpa [#allocation4], 1

</llo_original>
